<compile_context>
chip_gen: v7x
topology: tpu7x:2x2x1
jax: 0.10.0
libtpu: 0.0.40
codegen_flags: <defaults>
</compile_context>

<pallas_src>
import math

import jax
import jax.numpy as jnp
from jax.experimental import pallas as pl
from jax.experimental.pallas import tpu as pltpu


def _round_up(x, m):
    return ((x + m - 1) // m) * m


_K_TILE = 512                      # K tile when the reduction axis is tiled
_K_TILE_THRESHOLD = 2048           # tile K only for deep layers
_RESIDENT_W_BYTES = 4 * 1024 * 1024
_VMEM_LIMIT = 40 * 1024 * 1024     # < v7x's 64 MiB physical, with headroom


# ----------------------------------------------------------------------------
# Pallas kernels: fused  (cols @ W_scaled) + shift  [optionally -> SiLU]
# (BN scale is folded into W in the wrapper, so the epilogue is one FMA+sigmoid)
# ----------------------------------------------------------------------------
def _make_mm_shift_kernel(apply_silu: bool):
    """Single-K-block variant: whole contraction axis resident."""
    def kernel(cols_ref, w_ref, shift_ref, o_ref):
        acc = jnp.dot(cols_ref[...], w_ref[...],
                      preferred_element_type=jnp.float32)
        y = acc + shift_ref[...]
        if apply_silu:
            y = y * jax.nn.sigmoid(y)          # SiLU, f32 epilogue (v5e-safe)
        o_ref[...] = y.astype(o_ref.dtype)
    return kernel


def _make_mm_shift_kernel_ktiled(apply_silu: bool):
    """K-tiled variant: grid axis 2 is the reduction, f32 VMEM accumulator."""
    def kernel(cols_ref, w_ref, shift_ref, o_ref, acc_ref):
        @pl.when(pl.program_id(2) == 0)
        def _():
            acc_ref[...] = jnp.zeros_like(acc_ref)

        acc_ref[...] += jnp.dot(cols_ref[...], w_ref[...],
                                preferred_element_type=jnp.float32)

        @pl.when(pl.program_id(2) == pl.num_programs(2) - 1)
        def _():
            y = acc_ref[...] + shift_ref[...]
            if apply_silu:
                y = y * jax.nn.sigmoid(y)
            o_ref[...] = y.astype(o_ref.dtype)
    return kernel


def _mm_bias_act(cols, w, shift, *, apply_silu: bool,
                 out_dtype=jnp.float32, tm: int = 1024):
    """cols: (M, Kf), w: (Kf, Cout), shift: (Cout,) -> (M, Cout) in out_dtype.

    - Inputs cast to bf16, f32 accumulation on the MXU.
    - Cout zero-padded to a multiple of 128 (lane-dense stores, full MXU N).
    - Kf aligned to 128 (or to the K tile when K is tiled) so loads are
      full-width and the reduction grid divides evenly.
    - Weight kept VMEM-resident (single block, fetched once) when small;
      otherwise Cout is tiled; for Kf > 2048 the reduction axis gets its own
      "arbitrary" grid axis with an f32 accumulator (bounds VMEM on v7x).
    - No row padding: grid = cdiv(M, tm); ragged tail rows are masked on store.
    """
    M, Kf = cols.shape
    Cout = w.shape[1]

    use_k_tiling = Kf > _K_TILE_THRESHOLD
    k_align = _K_TILE if use_k_tiling else 128
    Kf_p = _round_up(Kf, k_align)
    if Kf_p != Kf:
        cols = jnp.pad(cols, ((0, 0), (0, Kf_p - Kf)))
        w = jnp.pad(w, ((0, Kf_p - Kf), (0, 0)))

    Cout_pad = _round_up(Cout, 128)
    if Cout_pad != Cout:
        w = jnp.pad(w, ((0, 0), (0, Cout_pad - Cout)))
        shift = jnp.pad(shift, (0, Cout_pad - Cout))

    # Row tiling: big tiles amortize the ~0.35us/step overhead, but keep at
    # least 2 i-tiles when there is real work so v7x's 2 TensorCores both run.
    tm = min(tm, _round_up(M, 8))
    if M >= 512 and pl.cdiv(M, tm) < 2:
        tm = _round_up(pl.cdiv(M, 2), 8)

    shift2 = shift.reshape(1, Cout_pad).astype(jnp.float32)
    cols_bf = cols.astype(jnp.bfloat16)
    w_bf = w.astype(jnp.bfloat16)

    out_bytes = M * Cout_pad * jnp.dtype(out_dtype).itemsize
    cost = pl.CostEstimate(
        flops=2 * M * Kf_p * Cout_pad,
        transcendentals=(M * Cout_pad) if apply_silu else 0,
        bytes_accessed=M * Kf_p * 2 + Kf_p * Cout_pad * 2 + out_bytes)

    if not use_k_tiling:
        # Keep the whole weight resident in VMEM when it is small enough:
        # index_map is constant, so it is DMA'd exactly once per call.
        weight_resident = (Kf_p * Cout_pad * 2 <= _RESIDENT_W_BYTES
                           and Cout_pad <= 1024)
        if weight_resident:
            tn = Cout_pad
            w_index = lambda i, j: (0, 0)
        else:
            tn = 256 if Cout_pad % 256 == 0 else 128
            w_index = lambda i, j: (0, j)
        grid = (pl.cdiv(M, tm), Cout_pad // tn)
        out = pl.pallas_call(
            _make_mm_shift_kernel(apply_silu),
            out_shape=jax.ShapeDtypeStruct((M, Cout_pad), out_dtype),
            grid=grid,
            in_specs=[
                pl.BlockSpec((tm, Kf_p), lambda i, j: (i, 0)),   # cols (bf16)
                pl.BlockSpec((Kf_p, tn), w_index),               # weight (bf16)
                pl.BlockSpec((1, tn), lambda i, j: (0, j)),      # bias/BN shift
            ],
            out_specs=pl.BlockSpec((tm, tn), lambda i, j: (i, j)),
            compiler_params=pltpu.CompilerParams(
                dimension_semantics=("parallel", "parallel"),
                vmem_limit_bytes=_VMEM_LIMIT),
            cost_estimate=cost,
        )(cols_bf, w_bf, shift2)
    else:
        tk = _K_TILE
        tn = 256 if Cout_pad % 256 == 0 else 128
        grid = (pl.cdiv(M, tm), Cout_pad // tn, Kf_p // tk)
        out = pl.pallas_call(
            _make_mm_shift_kernel_ktiled(apply_silu),
            out_shape=jax.ShapeDtypeStruct((M, Cout_pad), out_dtype),
            grid=grid,
            in_specs=[
                pl.BlockSpec((tm, tk), lambda i, j, k: (i, k)),  # cols tile
                pl.BlockSpec((tk, tn), lambda i, j, k: (k, j)),  # weight tile
                pl.BlockSpec((1, tn), lambda i, j, k: (0, j)),   # shift
            ],
            out_specs=pl.BlockSpec((tm, tn), lambda i, j, k: (i, j)),
            scratch_shapes=[pltpu.VMEM((tm, tn), jnp.float32)],
            compiler_params=pltpu.CompilerParams(
                dimension_semantics=("parallel", "parallel", "arbitrary"),
                vmem_limit_bytes=_VMEM_LIMIT),
            cost_estimate=cost,
        )(cols_bf, w_bf, shift2)

    return out[:, :Cout] if Cout_pad != Cout else out


# ----------------------------------------------------------------------------
# Plain-JAX glue: NHWC bilinear deformable im2col (lane-contiguous gathers).
# ----------------------------------------------------------------------------
def _deform_im2col_nhwc(x_nhwc, dy, dx, K, stride, pad, dil, k_pad_to=None):
    """Bilinear deformable im2col (torchvision deform_conv2d semantics).

    x_nhwc: (N, H, W, C) f32;  dy, dx: (N, Ho, Wo, K*K) learned offsets (f32).
    Returns (N*Ho*Wo, k_pad_to or C*K*K) bf16, columns ordered (c, kh, kw).
    """
    N, H, W, C = x_nhwc.shape
    Ho, Wo = dy.shape[1], dy.shape[2]
    KK = K * K

    oy = (jnp.arange(Ho) * stride - pad).astype(jnp.float32)
    ox = (jnp.arange(Wo) * stride - pad).astype(jnp.float32)
    ky, kx = jnp.meshgrid(jnp.arange(K) * dil, jnp.arange(K) * dil,
                          indexing="ij")
    ky = ky.reshape(-1).astype(jnp.float32)                 # (K*K,) kh-major
    kx = kx.reshape(-1).astype(jnp.float32)

    sy = oy[None, :, None, None] + ky[None, None, None, :] + dy   # (N,Ho,Wo,KK)
    sx = ox[None, None, :, None] + kx[None, None, None, :] + dx

    y0 = jnp.floor(sy)
    x0 = jnp.floor(sx)
    ly = sy - y0
    lx = sx - x0
    hy = 1.0 - ly
    hx = 1.0 - lx
    y0i = y0.astype(jnp.int32)
    x0i = x0.astype(jnp.int32)

    x_flat = x_nhwc.reshape(N, H * W, C)                    # lane-contiguous C

    def corner(yi, xi):
        valid = (yi >= 0) & (yi <= H - 1) & (xi >= 0) & (xi <= W - 1)
        yc = jnp.clip(yi, 0, H - 1)
        xc = jnp.clip(xi, 0, W - 1)
        idx = (yc * W + xc).reshape(N, -1)                  # (N, P)
        v = jax.vmap(lambda img, i: jnp.take(img, i, axis=0))(x_flat, idx)
        return v, valid.reshape(N, -1, 1).astype(x_nhwc.dtype)   # (N, P, C)

    v00, m00 = corner(y0i, x0i)
    v01, m01 = corner(y0i, x0i + 1)
    v10, m10 = corner(y0i + 1, x0i)
    v11, m11 = corner(y0i + 1, x0i + 1)

    w00 = (hy * hx).reshape(N, -1, 1)
    w01 = (hy * lx).reshape(N, -1, 1)
    w10 = (ly * hx).reshape(N, -1, 1)
    w11 = (ly * lx).reshape(N, -1, 1)

    vals = (w00 * (v00 * m00) + w01 * (v01 * m01) +
            w10 * (v10 * m10) + w11 * (v11 * m11))          # (N, P, C) f32

    vals = vals.reshape(N, Ho, Wo, KK, C).astype(jnp.bfloat16)
    cols = jnp.transpose(vals, (0, 1, 2, 4, 3)).reshape(N * Ho * Wo, C * KK)
    if k_pad_to is not None and k_pad_to > C * KK:
        cols = jnp.pad(cols, ((0, 0), (0, k_pad_to - C * KK)))
    return cols


# ----------------------------------------------------------------------------
# DCNv1 forward
# ----------------------------------------------------------------------------
def _prepare(x, params, kernel_size, stride, padding, dilation):
    """Glue: offset conv (f32, NHWC), deformable sampling, BN fold.

    Returns (cols bf16 (M, Kf_padded), w_scaled f32 (Kf_padded, C_out),
             shift f32 (C_out,), (N, Ho, Wo, C_out)).
    """
    N, C_in, H, W = x.shape
    K = kernel_size
    KK = K * K
    C_out = params["weight"].shape[0]

    x_nhwc = jnp.transpose(x, (0, 2, 3, 1))                 # (N, H, W, C_in)

    # offset branch: tiny 2*K*K-channel conv -> plain f32 XLA conv (no MXU
    # padding waste, coordinates stay f32).
    w_off_hwio = jnp.transpose(params["w_off"], (2, 3, 1, 0))   # (K,K,Cin,2KK)
    off = jax.lax.conv_general_dilated(
        x_nhwc, w_off_hwio,
        window_strides=(stride, stride),
        padding=[(padding, padding), (padding, padding)],
        rhs_dilation=(dilation, dilation),
        dimension_numbers=("NHWC", "HWIO", "NHWC"))
    off = off + params["b_off"][None, None, None, :]
    Ho, Wo = off.shape[1], off.shape[2]
    offsets = off.reshape(N, Ho, Wo, KK, 2)                 # pairs (dy, dx)
    dy = offsets[..., 0]
    dx = offsets[..., 1]

    # deformable sampling -> bf16 im2col columns, emitted already K-padded.
    Kf = C_in * KK
    k_align = _K_TILE if Kf > _K_TILE_THRESHOLD else 128
    k_target = _round_up(Kf, k_align)
    cols = _deform_im2col_nhwc(x_nhwc, dy, dx, K, stride, padding, dilation,
                               k_pad_to=k_target)

    # fold BN (eval-mode) scale into the main weight; epilogue = add + SiLU.
    w_main = params["weight"].reshape(C_out, Kf).T          # (Kf, C_out)
    inv_std = 1.0 / jnp.sqrt(params["bn_var"] + 1e-5)
    scale = params["bn_gamma"] * inv_std
    shift = (params["bias"] - params["bn_mean"]) * scale + params["bn_beta"]
    w_scaled = w_main * scale[None, :]
    if k_target != Kf:
        w_scaled = jnp.pad(w_scaled, ((0, k_target - Kf), (0, 0)))
    return cols, w_scaled, shift, (N, Ho, Wo, C_out)


def dcnv1_forward(x, params, *, kernel_size=3, stride=1, padding=1, dilation=1):
    """x: (N, C_in, H, W) f32  ->  (N, C_out, H_out, W_out) f32."""
    cols, w_scaled, shift, (N, Ho, Wo, C_out) = _prepare(
        x, params, kernel_size, stride, padding, dilation)
    out_flat = _mm_bias_act(cols, w_scaled, shift, apply_silu=True)
    out = out_flat.reshape(N, Ho, Wo, C_out)
    # TODO(synk): keep NHWC / bf16 here if the surrounding network accepts it
    # (drops a full-HBM transpose pass and halves writeback).
    return jnp.transpose(out, (0, 3, 1, 2))                 # NCHW f32


# ----------------------------------------------------------------------------
# Deterministic parameter construction (shapes from DCNv1.__init__)
# ----------------------------------------------------------------------------
def make_params(key, c_in, c_out, k):
    kk = k * k
    ks = jax.random.split(key, 6)
    std = 1.0 / math.sqrt(c_in * kk)
    weight = jax.random.uniform(ks[0], (c_out, c_in, k, k), jnp.float32,
                                minval=-std, maxval=std)
    bias = jnp.zeros((c_out,), jnp.float32)                 # module zeroes bias
    # module zero-inits conv_offset; use small deterministic values instead so
    # the bilinear-sampling path is actually exercised.
    w_off = 0.05 * jax.random.normal(ks[1], (2 * kk, c_in, k, k), jnp.float32)
    b_off = 0.05 * jax.random.normal(ks[2], (2 * kk,), jnp.float32)
    bn_gamma = 1.0 + 0.1 * jax.random.normal(ks[3], (c_out,), jnp.float32)
    bn_beta = 0.1 * jax.random.normal(ks[4], (c_out,), jnp.float32)
    bn_mean = 0.1 * jax.random.normal(ks[5], (c_out,), jnp.float32)
    bn_var = jnp.ones((c_out,), jnp.float32)
    return dict(weight=weight, bias=bias, w_off=w_off, b_off=b_off,
                bn_gamma=bn_gamma, bn_beta=bn_beta,
                bn_mean=bn_mean, bn_var=bn_var)


if __name__ == "__main__":
    key = jax.random.PRNGKey(0)
    kx, kp, k1, k2, k3, k4 = jax.random.split(key, 6)

    N, C_in, H, W = 2, 4, 16, 16
    C_out, K = 8, 3
    x = jax.random.normal(kx, (N, C_in, H, W), jnp.float32)
    params = make_params(kp, C_in, C_out, K)

    fwd = jax.jit(lambda x_: dcnv1_forward(x_, params))
    out = fwd(x)
    jax.block_until_ready(out)
    assert out.shape == (N, C_out, H, W), out.shape
    assert bool(jnp.all(jnp.isfinite(out)))

    # End-to-end wiring check: identical glue, plain f32 matmul reference
    # (differences come only from the bf16 weight feed to the MXU).
    cols, w_s, shift, (Nn, Ho, Wo, Co) = _prepare(x, params, K, 1, 1, 1)
    ref_flat = cols.astype(jnp.float32) @ w_s + shift[None, :]
    ref_flat = ref_flat * jax.nn.sigmoid(ref_flat)
    ref = jnp.transpose(ref_flat.reshape(Nn, Ho, Wo, Co), (0, 3, 1, 2))
    assert jnp.allclose(out, ref, atol=3e-2, rtol=3e-2)

    # Standalone check: resident-weight single-K-block path (Kf<128 padding).
    M2, Kf2, Co2 = 320, 64, 40
    c2 = jax.random.normal(k1, (M2, Kf2), jnp.float32)
    w2 = jax.random.normal(k2, (Kf2, Co2), jnp.float32) / math.sqrt(Kf2)
    s2 = 0.1 * jax.random.normal(k3, (Co2,), jnp.float32)
    got2 = _mm_bias_act(c2, w2, s2, apply_silu=False)
    ref2 = (c2.astype(jnp.bfloat16).astype(jnp.float32)
            @ w2.astype(jnp.bfloat16).astype(jnp.float32)) + s2[None, :]
    assert jnp.allclose(got2, ref2, atol=3e-2, rtol=3e-2)

    # Standalone check: K-tiled accumulator path (deep-layer regime, Kf>2048).
    M3, Kf3, Co3 = 128, 2560, 192
    c3 = jax.random.normal(k4, (M3, Kf3), jnp.float32)
    w3 = jax.random.normal(k1, (Kf3, Co3), jnp.float32) / math.sqrt(Kf3)
    s3 = 0.1 * jax.random.normal(k2, (Co3,), jnp.float32)
    got3 = _mm_bias_act(c3, w3, s3, apply_silu=True)
    a3 = (c3.astype(jnp.bfloat16).astype(jnp.float32)
          @ w3.astype(jnp.bfloat16).astype(jnp.float32)) + s3[None, :]
    ref3 = a3 * jax.nn.sigmoid(a3)
    assert jnp.allclose(got3, ref3, atol=3e-2, rtol=3e-2)

    print("KERNEL_OK")
</pallas_src>

<mosaic_0001>
module attributes {stable_mosaic.version = 11 : i64} {
  func.func @kernel(%arg0: i32, %arg1: i32, %arg2: memref<256x128xbf16, #tpu.memory_space<vmem>>, %arg3: memref<128x128xbf16, #tpu.memory_space<vmem>>, %arg4: memref<1x128xf32, #tpu.memory_space<vmem>>, %arg5: memref<256x128xf32, #tpu.memory_space<vmem>>) attributes {dimension_semantics = [#tpu.dimension_semantics<parallel>, #tpu.dimension_semantics<parallel>], iteration_bounds = array<i64: 2, 1>, scalar_prefetch = 0 : i64, scratch_operands = 0 : i64, tpu.core_type = #tpu.core_type<tc>, window_params = [{transform_indices = @transform_0, window_bounds = array<i64: 256, 128>}, {pipeline_mode = #tpu.pipeline_mode<synchronous>, transform_indices = @transform_1, window_bounds = array<i64: 128, 128>}, {transform_indices = @transform_2, window_bounds = array<i64: 1, 128>}, {transform_indices = @transform_3, window_bounds = array<i64: 256, 128>}]} {
    %c0 = arith.constant 0 : index
    %c0_0 = arith.constant 0 : index
    %0 = vector.load %arg2[%c0, %c0_0] : memref<256x128xbf16, #tpu.memory_space<vmem>>, vector<256x128xbf16>
    %c0_1 = arith.constant 0 : index
    %c0_2 = arith.constant 0 : index
    %1 = vector.load %arg3[%c0_1, %c0_2] : memref<128x128xbf16, #tpu.memory_space<vmem>>, vector<128x128xbf16>
    %cst = arith.constant dense<0.000000e+00> : vector<256x128xf32>
    %2 = tpu.matmul %0, %1, %cst {dimension_numbers = #tpu.dot_dimension_numbers<[1], [0], [0], [1], [0, 0, 1, 1], [], []>} : vector<256x128xbf16>, vector<128x128xbf16>, vector<256x128xf32> -> vector<256x128xf32>
    %c0_3 = arith.constant 0 : index
    %c0_4 = arith.constant 0 : index
    %3 = vector.load %arg4[%c0_3, %c0_4] : memref<1x128xf32, #tpu.memory_space<vmem>>, vector<1x128xf32>
    %4 = vector.broadcast %3 : vector<1x128xf32> to vector<256x128xf32>
    %5 = arith.addf %2, %4 : vector<256x128xf32>
    %6 = arith.negf %5 : vector<256x128xf32>
    %7 = math.exp %6 : vector<256x128xf32>
    %cst_5 = arith.constant 1.000000e+00 : f32
    %8 = vector.broadcast %cst_5 : f32 to vector<256x128xf32>
    %9 = arith.addf %8, %7 : vector<256x128xf32>
    %10 = arith.divf %8, %9 : vector<256x128xf32>
    %11 = arith.mulf %5, %10 : vector<256x128xf32>
    %c0_6 = arith.constant 0 : index
    %c0_7 = arith.constant 0 : index
    %12 = vector.load %arg5[%c0_6, %c0_7] : memref<256x128xf32, #tpu.memory_space<vmem>>, vector<256x128xf32>
    tpu.vector_store %arg5[%c0_6, %c0_7], %11 {strides = array<i32>} : memref<256x128xf32, #tpu.memory_space<vmem>>, vector<256x128xf32>,
    return
  }
  func.func @transform_0(%arg0: i32, %arg1: i32) -> (i32, i32) {
    %c0_i32 = arith.constant 0 : i32
    %c0_i32_0 = arith.constant 0 : i32
    return %arg0, %c0_i32 : i32, i32
  }
  func.func @transform_1(%arg0: i32, %arg1: i32) -> (i32, i32) {
    %c0_i32 = arith.constant 0 : i32
    %c0_i32_0 = arith.constant 0 : i32
    %c0_i32_1 = arith.constant 0 : i32
    return %c0_i32, %c0_i32_0 : i32, i32
  }
  func.func @transform_2(%arg0: i32, %arg1: i32) -> (i32, i32) {
    %c0_i32 = arith.constant 0 : i32
    %c0_i32_0 = arith.constant 0 : i32
    return %c0_i32, %arg1 : i32, i32
  }
  func.func @transform_3(%arg0: i32, %arg1: i32) -> (i32, i32) {
    %c0_i32 = arith.constant 0 : i32
    return %arg0, %arg1 : i32, i32
  }
}

</mosaic_0001>

<llo_original>
// kernel: _lambda_.1
$region0: #{_lambda_.1}
  #allocation0 [shape = 'u32[]', space=smem, size = 0x4, offset = 0x4, fixed_abs, tag = 'smem constant byte address 0x4 - core index']
  #allocation1 [shape = 'u32[144,128]{1,0:T(1,128)}', space=vmem, size = 0x12000, scoped, tag = 'internal scratch']
  %s0 = inlined_call_operand.vmem [shape: bf16[512,128], index: 0, kind: input, shape index: {}]
  %s1 = inlined_call_operand.vmem [shape: bf16[128,128], index: 1, kind: input, shape index: {}]
  %s2 = inlined_call_operand.vmem [shape: f32[1,128], index: 2, kind: input, shape index: {}]
  %s3 = inlined_call_operand.vmem [shape: f32[512,128], index: 3, kind: output, shape index: {}]
  %s4 = sld [smem:[#allocation0]]
  $region45: #{_lambda_.1} parent=0
    _
  %s6 = ssub.s32 1, %s4
  %s7 = scalar_select 0, %s6, %s4
  loop: start=0, step=1, limit=4
  $region2: #{_lambda_.1} parent=0 // loop_pre_header
    _
  $region3: #{_lambda_.1} parent=0 // loop_header
    %s9 = sphi 0, %s13
    %p10 = scmp.ge.s32.totalorder %s9, 4
    %s16 = sphi 0, %s28
    %s17 = sphi 0, %s24
    %s18 = sphi 0, %s16
    %s19 = sphi 0, %s17
    %s20 = sphi 0, %s18
    %s21 = sphi 0, %s19
    %s31 = sphi 0, %s33
    %s34 = sphi 0, %s31
    %s35 = sphi 0, %s34
    %s51 = sphi 0, %s35
    %s55 = sphi 0, %s55
    %s57 = sphi 0, %s55
    %s58 = sphi 0, %s57
    %s72 = sphi 0, %s58
    %s78 = sphi 0, %s80
    %s81 = sphi 0, %s78
    %s82 = sphi 0, %s81
    %s98 = sphi 0, %s82
    %s106 = sphi 0, %s108
    %s109 = sphi 0, %s106
    %s110 = sphi 0, %s109
    %s126 = sphi 0, %s110
  $region4: #{_lambda_.1} parent=0 // loop_header_branch
    %12 = sbr.rel (%p10) target = $region8
  $region5: #{_lambda_.1} parent=0 // loop_body
    %s14 = ssub.s32 %s9, 1
    %s15 = ssub.s32 %s9, 2
    %s22 = sadd.s32 1, %s17
    %p23 = scmp.ge.s32.totalorder %s22, 1
    %s24 = scalar_select %p23, 0, %s22
    %s25 = sadd.s32 1, %s16
    %s26 = scalar_select %p23, %s25, %s16
    %p27 = scmp.ge.s32.totalorder %s26, 2
    %s28 = scalar_select %p27, 0, %s26
    %s29 = ssub.s32 %s16, %s28
    %p30 = scmp.eq.s32.totalorder %s29, 0
    %s32 = sadd.s32 %s31, 1
    %s33 = scalar_select %p30, %s31, %s32
    %p36 = pneg %p30
    %p37 = scmp.eq.s32.totalorder %s9, 1
    %p38 = por %p36, %p37
    %p39 = scmp.ne.s32.totalorder %s31, %s34
    %p40 = scmp.eq.s32.totalorder %s9, 0
    %p41 = por %p39, %p40
    %p42 = scmp.ne.s32.totalorder %s31, %s34
    %p43 = scmp.eq.s32.totalorder %s14, 1
    %p44 = por %p42, %p43
    %p45 = scmp.ne.s32.totalorder %s34, %s35
    %p46 = scmp.eq.s32.totalorder %s14, 0
    %p47 = por %p45, %p46
    %p48 = scmp.ne.s32.totalorder %s34, %s35
    %p49 = scmp.eq.s32.totalorder %s15, 1
    %p50 = por %p48, %p49
    %p52 = scmp.ne.s32.totalorder %s35, %s51
    %p53 = scmp.eq.s32.totalorder %s15, 0
    %p54 = por %p52, %p53
    %s56 = sadd.s32 %s55, 1
    %p59 = scmp.eq.s32.totalorder %s9, 1
    %p60 = scmp.ne.s32.totalorder %s55, %s57
    %p61 = scmp.eq.s32.totalorder %s9, 0
    %p62 = por %p60, %p61
    %p63 = scmp.ne.s32.totalorder %s55, %s57
    %p64 = scmp.eq.s32.totalorder %s14, 1
    %p65 = por %p63, %p64
    %p66 = scmp.ne.s32.totalorder %s57, %s58
    %p67 = scmp.eq.s32.totalorder %s14, 0
    %p68 = por %p66, %p67
    %p69 = scmp.ne.s32.totalorder %s57, %s58
    %p70 = scmp.eq.s32.totalorder %s15, 1
    %p71 = por %p69, %p70
    %p73 = scmp.ne.s32.totalorder %s58, %s72
    %p74 = scmp.eq.s32.totalorder %s15, 0
    %p75 = por %p73, %p74
    %s76 = ssub.s32 %s17, %s24
    %p77 = scmp.eq.s32.totalorder %s76, 0
    %s79 = sadd.s32 %s78, 1
    %s80 = scalar_select %p77, %s78, %s79
    %p83 = pneg %p77
    %p84 = scmp.eq.s32.totalorder %s9, 1
    %p85 = por %p83, %p84
    %p86 = scmp.ne.s32.totalorder %s78, %s81
    %p87 = scmp.eq.s32.totalorder %s9, 0
    %p88 = por %p86, %p87
    %p89 = scmp.ne.s32.totalorder %s78, %s81
    %p90 = scmp.eq.s32.totalorder %s14, 1
    %p91 = por %p89, %p90
    %p92 = scmp.ne.s32.totalorder %s81, %s82
    %p93 = scmp.eq.s32.totalorder %s14, 0
    %p94 = por %p92, %p93
    %p95 = scmp.ne.s32.totalorder %s81, %s82
    %p96 = scmp.eq.s32.totalorder %s15, 1
    %p97 = por %p95, %p96
    %p99 = scmp.ne.s32.totalorder %s82, %s98
    %p100 = scmp.eq.s32.totalorder %s15, 0
    %p101 = por %p99, %p100
    %s102 = ssub.s32 %s16, %s28
    %s103 = ssub.s32 %s17, %s24
    %s104 = sor.u32 %s102, %s103
    %p105 = scmp.eq.s32.totalorder %s104, 0
    %s107 = sadd.s32 %s106, 1
    %s108 = scalar_select %p105, %s106, %s107
    %p111 = pneg %p105
    %p112 = scmp.eq.s32.totalorder %s9, 1
    %p113 = por %p111, %p112
    %p114 = scmp.ne.s32.totalorder %s106, %s109
    %p115 = scmp.eq.s32.totalorder %s9, 0
    %p116 = por %p114, %p115
    %p117 = scmp.ne.s32.totalorder %s106, %s109
    %p118 = scmp.eq.s32.totalorder %s14, 1
    %p119 = por %p117, %p118
    %p120 = scmp.ne.s32.totalorder %s109, %s110
    %p121 = scmp.eq.s32.totalorder %s14, 0
    %p122 = por %p120, %p121
    %p123 = scmp.ne.s32.totalorder %s109, %s110
    %p124 = scmp.eq.s32.totalorder %s15, 1
    %p125 = por %p123, %p124
    %p127 = scmp.ne.s32.totalorder %s110, %s126
    %p128 = scmp.eq.s32.totalorder %s15, 0
    %p129 = por %p127, %p128
    %p130 = scmp.le.s32.totalorder 1, %s9
    %p131 = scmp.lt.s32.totalorder %s9, 3
    %p132 = pnand %p130, %p131
    %p133 = pneg %p132
    // Predicated region
    $region9: #{_lambda_.1} parent=5 // pred_check
      _
    $region10: #{_lambda_.1} parent=5 // pred_check_branch
      %135 = sbr.rel (%p132) target = $region12
    $region11: #{_lambda_.1} parent=5 // pred_region
      %s136 = ssub.s32 %s9, 1
      // Predicated region
      $region13: #{_lambda_.1} parent=11 // pred_check
        %p137 = pneg %p68
      $region14: #{_lambda_.1} parent=11 // pred_check_branch
        %139 = sbr.rel (%p137) target = $region16
      $region15: #{_lambda_.1} parent=11 // pred_region
        _
      $region16: #{_lambda_.1} parent=11 // pred_fallthru
        _
      // Predicated region
      $region17: #{_lambda_.1} parent=11 // pred_check
        %p140 = pneg %p94
      $region18: #{_lambda_.1} parent=11 // pred_check_branch
        %142 = sbr.rel (%p140) target = $region20
      $region19: #{_lambda_.1} parent=11 // pred_region
        %p143 = scmp.lt.s32.totalorder %s19, 0
        %s144 = scalar_select %p143, %s19, 0
        %s145 = scalar_lea.vmem %s2, %s144
      $region20: #{_lambda_.1} parent=11 // pred_fallthru
        _
    $region12: #{_lambda_.1} parent=5 // pred_fallthru
      _
    %p146 = scmp.lt.s32.totalorder %s9, 2
    // Predicated region
    $region21: #{_lambda_.1} parent=5 // pred_check
      %p147 = pneg %p146
    $region22: #{_lambda_.1} parent=5 // pred_check_branch
      %149 = sbr.rel (%p147) target = $region24
    $region23: #{_lambda_.1} parent=5 // pred_region
      // Predicated region
      $region25: #{_lambda_.1} parent=23 // pred_check
        %p150 = pneg %p41
      $region26: #{_lambda_.1} parent=23 // pred_check_branch
        %152 = sbr.rel (%p150) target = $region28
      $region27: #{_lambda_.1} parent=23 // pred_region
        %s153 = smul.u32 32, %s16
        %p154 = scmp.lt.s32.totalorder %s153, 63
        %s155 = scalar_select %p154, %s153, 63
        %s156 = smul.addr %s155, 4
        %s157 = scalar_lea.vmem %s0, %s156
        %s158 = smul.u32 32, %s16
      $region28: #{_lambda_.1} parent=23 // pred_fallthru
        _
    $region24: #{_lambda_.1} parent=5 // pred_fallthru
      _
    %p159 = scmp.le.s32.totalorder 1, %s9
    %p160 = scmp.lt.s32.totalorder %s9, 3
    %p161 = pnand %p159, %p160
    %p162 = pneg %p161
    // Predicated region
    $region29: #{_lambda_.1} parent=5 // pred_check
      _
    $region30: #{_lambda_.1} parent=5 // pred_check_branch
      %164 = sbr.rel (%p161) target = $region32
    $region31: #{_lambda_.1} parent=5 // pred_region
      %s165 = ssub.s32 %s9, 1
      %s166 = smul.u32 32, %s18
      %p167 = scmp.lt.s32.totalorder %s166, 63
      %s168 = scalar_select %p167, %s166, 63
      %s169 = smul.addr %s168, 4
      %s170 = scalar_lea.vmem %s0, %s169
      %p171 = pneg %p47
      %p172 = pneg %p44
      %p173 = pneg %p68
      %p174 = pneg %p65
      %p175 = scmp.lt.s32.totalorder %s19, 0
      %s176 = scalar_select %p175, %s19, 0
      %s177 = scalar_lea.vmem %s2, %s176
      %p178 = pneg %p94
      %p179 = pneg %p91
      %p180 = pneg %p122
      %p181 = pneg %p119
      %s182 = smul.u32 32, %s18
      %p183 = scmp.lt.s32.totalorder %s182, 63
      %s184 = scalar_select %p183, %s182, 63
      %p185 = scmp.lt.s32.totalorder %s19, 0
      %s186 = scalar_select %p185, %s19, 0
      %s187 = sadd.s32 %s186, %s184
      %s188 = smul.addr %s187, 8
      %s189 = scalar_lea.vmem %s3, %s188
      %s190 = smul.u32 32, %s18
      %p191 = scmp.lt.s32.totalorder %s190, 63
      %s192 = scalar_select %p191, %s190, 63
      %s193 = smul.addr %s192, 4
      %s194 = scalar_lea.vmem %s0, %s193
      %s195 = smul.u32 32, %s18
      %p196 = scmp.lt.s32.totalorder %s19, 0
      %s197 = scalar_select %p196, %s19, 0
      %s198 = scalar_lea.vmem %s2, %s197
      %s199 = smul.u32 32, %s18
      %p200 = scmp.lt.s32.totalorder %s199, 63
      %s201 = scalar_select %p200, %s199, 63
      %p202 = scmp.lt.s32.totalorder %s19, 0
      %s203 = scalar_select %p202, %s19, 0
      %s204 = sadd.s32 %s203, %s201
      %s205 = smul.addr %s204, 8
      %s206 = scalar_lea.vmem %s3, %s205
      %s207 = smul.u32 32, %s18
      %v209 = vld [vmem:[%s194] sm:$0xf]
      %v210 = vld [vmem:[%s194 + $0x4] sm:$0xf]
      %v211 = vld [vmem:[%s194 + $0x8] sm:$0xf]
      %v212 = vld [vmem:[%s194 + $0xc] sm:$0xf]
      %v213 = vld [vmem:[%s194 + $0x10] sm:$0xf]
      %v214 = vld [vmem:[%s194 + $0x14] sm:$0xf]
      %v215 = vld [vmem:[%s194 + $0x18] sm:$0xf]
      %v216 = vld [vmem:[%s194 + $0x1c] sm:$0xf]
      %v217 = vld [vmem:[%s194 + $0x20] sm:$0xf]
      %v218 = vld [vmem:[%s194 + $0x24] sm:$0xf]
      %v219 = vld [vmem:[%s194 + $0x28] sm:$0xf]
      %v220 = vld [vmem:[%s194 + $0x2c] sm:$0xf]
      %v221 = vld [vmem:[%s194 + $0x30] sm:$0xf]
      %v222 = vld [vmem:[%s194 + $0x34] sm:$0xf]
      %v223 = vld [vmem:[%s194 + $0x38] sm:$0xf]
      %v224 = vld [vmem:[%s194 + $0x3c] sm:$0xf]
      %v225 = vld [vmem:[%s194 + $0x40] sm:$0xf]
      %v226 = vld [vmem:[%s194 + $0x44] sm:$0xf]
      %v227 = vld [vmem:[%s194 + $0x48] sm:$0xf]
      %v228 = vld [vmem:[%s194 + $0x4c] sm:$0xf]
      %v229 = vld [vmem:[%s194 + $0x50] sm:$0xf]
      %v230 = vld [vmem:[%s194 + $0x54] sm:$0xf]
      %v231 = vld [vmem:[%s194 + $0x58] sm:$0xf]
      %v232 = vld [vmem:[%s194 + $0x5c] sm:$0xf]
      %v233 = vld [vmem:[%s194 + $0x60] sm:$0xf]
      %v234 = vld [vmem:[%s194 + $0x64] sm:$0xf]
      %v235 = vld [vmem:[%s194 + $0x68] sm:$0xf]
      %v236 = vld [vmem:[%s194 + $0x6c] sm:$0xf]
      %v237 = vld [vmem:[%s194 + $0x70] sm:$0xf]
      %v238 = vld [vmem:[%s194 + $0x74] sm:$0xf]
      %v239 = vld [vmem:[%s194 + $0x78] sm:$0xf]
      %v240 = vld [vmem:[%s194 + $0x7c] sm:$0xf]
      %v241 = vld [vmem:[%s1] sm:$0xf]
      %v242 = vld [vmem:[%s1 + $0x4] sm:$0xf]
      %v243 = vld [vmem:[%s1 + $0x8] sm:$0xf]
      %v244 = vld [vmem:[%s1 + $0xc] sm:$0xf]
      %v245 = vld [vmem:[%s1 + $0x10] sm:$0xf]
      %v246 = vld [vmem:[%s1 + $0x14] sm:$0xf]
      %v247 = vld [vmem:[%s1 + $0x18] sm:$0xf]
      %v248 = vld [vmem:[%s1 + $0x1c] sm:$0xf]
      %v249 = vld [vmem:[%s1 + $0x20] sm:$0xf]
      %v250 = vld [vmem:[%s1 + $0x24] sm:$0xf]
      %v251 = vld [vmem:[%s1 + $0x28] sm:$0xf]
      %v252 = vld [vmem:[%s1 + $0x2c] sm:$0xf]
      %v253 = vld [vmem:[%s1 + $0x30] sm:$0xf]
      %v254 = vld [vmem:[%s1 + $0x34] sm:$0xf]
      %v255 = vld [vmem:[%s1 + $0x38] sm:$0xf]
      %v256 = vld [vmem:[%s1 + $0x3c] sm:$0xf]
      %v257 = vld [vmem:[%s198] sm:$0x1]
      %v259 = vlaneseq
      %v260 = vshrl.u32 %v259, 7
      %v261 = vsub.s32 0, %v260
      %v262 = vrot.slane %v257, %v261
      %v296 = vunpack.c.l.b16 %v209
      %v297 = vunpack.c.l.b16 %v210
      %v298 = vunpack.c.l.b16 %v211
      %v299 = vunpack.c.l.b16 %v212
      %v300 = vunpack.c.l.b16 %v213
      %v301 = vunpack.c.l.b16 %v214
      %v302 = vunpack.c.l.b16 %v215
      %v303 = vunpack.c.l.b16 %v216
      %v304 = vunpack.c.l.b16 %v217
      %v305 = vunpack.c.l.b16 %v218
      %v306 = vunpack.c.l.b16 %v219
      %v307 = vunpack.c.l.b16 %v220
      %v308 = vunpack.c.l.b16 %v221
      %v309 = vunpack.c.l.b16 %v222
      %v310 = vunpack.c.l.b16 %v223
      %v311 = vunpack.c.l.b16 %v224
      %v312 = vunpack.c.l.b16 %v225
      %v313 = vunpack.c.l.b16 %v226
      %v314 = vunpack.c.l.b16 %v227
      %v315 = vunpack.c.l.b16 %v228
      %v316 = vunpack.c.l.b16 %v229
      %v317 = vunpack.c.l.b16 %v230
      %v318 = vunpack.c.l.b16 %v231
      %v319 = vunpack.c.l.b16 %v232
      %v320 = vunpack.c.l.b16 %v233
      %v321 = vunpack.c.l.b16 %v234
      %v322 = vunpack.c.l.b16 %v235
      %v323 = vunpack.c.l.b16 %v236
      %v324 = vunpack.c.l.b16 %v237
      %v325 = vunpack.c.l.b16 %v238
      %v326 = vunpack.c.l.b16 %v239
      %v327 = vunpack.c.l.b16 %v240
      %v328 = vpack.c.b16 %v297, %v296
      %v329 = vpack.c.b16 %v299, %v298
      %v330 = vpack.c.b16 %v301, %v300
      %v331 = vpack.c.b16 %v303, %v302
      %v332 = vpack.c.b16 %v305, %v304
      %v333 = vpack.c.b16 %v307, %v306
      %v334 = vpack.c.b16 %v309, %v308
      %v335 = vpack.c.b16 %v311, %v310
      %v336 = vpack.c.b16 %v313, %v312
      %v337 = vpack.c.b16 %v315, %v314
      %v338 = vpack.c.b16 %v317, %v316
      %v339 = vpack.c.b16 %v319, %v318
      %v340 = vpack.c.b16 %v321, %v320
      %v341 = vpack.c.b16 %v323, %v322
      %v342 = vpack.c.b16 %v325, %v324
      %v343 = vpack.c.b16 %v327, %v326
      %v376 = vunpack.c.l.b16 %v241
      %v377 = vunpack.c.l.b16 %v242
      %v378 = vunpack.c.l.b16 %v243
      %v379 = vunpack.c.l.b16 %v244
      %v380 = vunpack.c.l.b16 %v245
      %v381 = vunpack.c.l.b16 %v246
      %v382 = vunpack.c.l.b16 %v247
      %v383 = vunpack.c.l.b16 %v248
      %v384 = vunpack.c.l.b16 %v249
      %v385 = vunpack.c.l.b16 %v250
      %v386 = vunpack.c.l.b16 %v251
      %v387 = vunpack.c.l.b16 %v252
      %v388 = vunpack.c.l.b16 %v253
      %v389 = vunpack.c.l.b16 %v254
      %v390 = vunpack.c.l.b16 %v255
      %v391 = vunpack.c.l.b16 %v256
      %v392 = vpack.c.b16 %v377, %v376
      %v393 = vpack.c.b16 %v379, %v378
      %v394 = vpack.c.b16 %v381, %v380
      %v395 = vpack.c.b16 %v383, %v382
      %v396 = vpack.c.b16 %v385, %v384
      %v397 = vpack.c.b16 %v387, %v386
      %v398 = vpack.c.b16 %v389, %v388
      %v399 = vpack.c.b16 %v391, %v390
      %408 = vmatprep.subr.bf16.mxu0 0
      %409 = vmatpush1.bf16.msra.mxu0 %v392
      %410 = vmatprep.subr.bf16.mxu0 0
      %411 = vmatpush1.bf16.msra.mxu0 %v393
      %412 = vmatprep.subr.bf16.mxu0 0
      %413 = vmatpush1.bf16.msra.mxu0 %v394
      %414 = vmatprep.subr.bf16.mxu0 0
      %415 = vmatpush1.bf16.msra.mxu0 %v395
      %416 = vmatprep.subr.bf16.mxu0 0
      %417 = vmatpush1.bf16.msra.mxu0 %v396
      %418 = vmatprep.subr.bf16.mxu0 0
      %419 = vmatpush1.bf16.msra.mxu0 %v397
      %420 = vmatprep.subr.bf16.mxu0 0
      %421 = vmatpush1.bf16.msra.mxu0 %v398
      %422 = vmatprep.subr.bf16.mxu0 0
      %423 = vmatpush1.bf16.msra.mxu0 %v399
      %424 = vmatprep.subr.bf16.mxu0 0
      %425 = vmatpush1.bf16.msra.mxu0 0
      %426 = vmatprep.subr.bf16.mxu0 0
      %427 = vmatpush1.bf16.msra.mxu0 0
      %428 = vmatprep.subr.bf16.mxu0 0
      %429 = vmatpush1.bf16.msra.mxu0 0
      %430 = vmatprep.subr.bf16.mxu0 0
      %431 = vmatpush1.bf16.msra.mxu0 0
      %432 = vmatprep.subr.bf16.mxu0 0
      %433 = vmatpush1.bf16.msra.mxu0 0
      %434 = vmatprep.subr.bf16.mxu0 0
      %435 = vmatpush1.bf16.msra.mxu0 0
      %436 = vmatprep.subr.bf16.mxu0 0
      %437 = vmatpush1.bf16.msra.mxu0 0
      %438 = vmatprep.subr.bf16.mxu0 0
      %439 = vmatpush1.bf16.msra.mxu0 0
      %440 = vmatprep.mubr.bf16.mxu0 0
      %441 = vmatmul.mubr.bf16.gmra.mrb[0].mxu0 %v328
      %v442 = vpop.f32.mrb[0].mxu0
      %v443 = vadd.f32 %v262, %v442
      %v444 = vpop.f32.mrb[0].mxu0
      %v445 = vpop.f32.mrb[0].mxu0
      %v446 = vadd.f32 %v262, %v445
      %v447 = vpop.f32.mrb[0].mxu0
      %448 = vmatprep.mubr.bf16.mxu0 0
      %449 = vmatmul.mubr.bf16.gmra.mrb[0].mxu0 %v329
      %v450 = vpop.f32.mrb[0].mxu0
      %v451 = vadd.f32 %v262, %v450
      %v452 = vpop.f32.mrb[0].mxu0
      %v453 = vpop.f32.mrb[0].mxu0
      %v454 = vadd.f32 %v262, %v453
      %v455 = vpop.f32.mrb[0].mxu0
      %456 = vmatprep.mubr.bf16.mxu0 0
      %457 = vmatmul.mubr.bf16.gmra.mrb[0].mxu0 %v330
      %v458 = vpop.f32.mrb[0].mxu0
      %v459 = vadd.f32 %v262, %v458
      %v460 = vpop.f32.mrb[0].mxu0
      %v461 = vpop.f32.mrb[0].mxu0
      %v462 = vadd.f32 %v262, %v461
      %v463 = vpop.f32.mrb[0].mxu0
      %464 = vmatprep.mubr.bf16.mxu0 0
      %465 = vmatmul.mubr.bf16.gmra.mrb[0].mxu0 %v331
      %v466 = vpop.f32.mrb[0].mxu0
      %v467 = vadd.f32 %v262, %v466
      %v468 = vpop.f32.mrb[0].mxu0
      %v469 = vpop.f32.mrb[0].mxu0
      %v470 = vadd.f32 %v262, %v469
      %v471 = vpop.f32.mrb[0].mxu0
      %472 = vmatprep.mubr.bf16.mxu0 0
      %473 = vmatmul.mubr.bf16.gmra.mrb[0].mxu0 %v332
      %v474 = vpop.f32.mrb[0].mxu0
      %v475 = vadd.f32 %v262, %v474
      %v476 = vpop.f32.mrb[0].mxu0
      %v477 = vpop.f32.mrb[0].mxu0
      %v478 = vadd.f32 %v262, %v477
      %v479 = vpop.f32.mrb[0].mxu0
      %480 = vmatprep.mubr.bf16.mxu0 0
      %481 = vmatmul.mubr.bf16.gmra.mrb[0].mxu0 %v333
      %v482 = vpop.f32.mrb[0].mxu0
      %v483 = vadd.f32 %v262, %v482
      %v484 = vpop.f32.mrb[0].mxu0
      %v485 = vpop.f32.mrb[0].mxu0
      %v486 = vadd.f32 %v262, %v485
      %v487 = vpop.f32.mrb[0].mxu0
      %488 = vmatprep.mubr.bf16.mxu0 0
      %489 = vmatmul.mubr.bf16.gmra.mrb[0].mxu0 %v334
      %v490 = vpop.f32.mrb[0].mxu0
      %v491 = vadd.f32 %v262, %v490
      %v492 = vpop.f32.mrb[0].mxu0
      %v493 = vpop.f32.mrb[0].mxu0
      %v494 = vadd.f32 %v262, %v493
      %v495 = vpop.f32.mrb[0].mxu0
      %496 = vmatprep.mubr.bf16.mxu0 0
      %497 = vmatmul.mubr.bf16.gmra.mrb[0].mxu0 %v335
      %v498 = vpop.f32.mrb[0].mxu0
      %v499 = vadd.f32 %v262, %v498
      %v500 = vpop.f32.mrb[0].mxu0
      %v501 = vpop.f32.mrb[0].mxu0
      %v502 = vadd.f32 %v262, %v501
      %v503 = vpop.f32.mrb[0].mxu0
      %504 = vmatprep.mubr.bf16.mxu0 0
      %505 = vmatmul.mubr.bf16.gmra.mrb[0].mxu0 %v336
      %v506 = vpop.f32.mrb[0].mxu0
      %v507 = vadd.f32 %v262, %v506
      %v508 = vpop.f32.mrb[0].mxu0
      %v509 = vpop.f32.mrb[0].mxu0
      %v510 = vadd.f32 %v262, %v509
      %v511 = vpop.f32.mrb[0].mxu0
      %512 = vmatprep.mubr.bf16.mxu0 0
      %513 = vmatmul.mubr.bf16.gmra.mrb[0].mxu0 %v337
      %v514 = vpop.f32.mrb[0].mxu0
      %v515 = vadd.f32 %v262, %v514
      %v516 = vpop.f32.mrb[0].mxu0
      %v517 = vpop.f32.mrb[0].mxu0
      %v518 = vadd.f32 %v262, %v517
      %v519 = vpop.f32.mrb[0].mxu0
      %520 = vmatprep.mubr.bf16.mxu0 0
      %521 = vmatmul.mubr.bf16.gmra.mrb[0].mxu0 %v338
      %v522 = vpop.f32.mrb[0].mxu0
      %v523 = vadd.f32 %v262, %v522
      %v524 = vpop.f32.mrb[0].mxu0
      %v525 = vpop.f32.mrb[0].mxu0
      %v526 = vadd.f32 %v262, %v525
      %v527 = vpop.f32.mrb[0].mxu0
      %528 = vmatprep.mubr.bf16.mxu0 0
      %529 = vmatmul.mubr.bf16.gmra.mrb[0].mxu0 %v339
      %v530 = vpop.f32.mrb[0].mxu0
      %v531 = vadd.f32 %v262, %v530
      %v532 = vpop.f32.mrb[0].mxu0
      %v533 = vpop.f32.mrb[0].mxu0
      %v534 = vadd.f32 %v262, %v533
      %v535 = vpop.f32.mrb[0].mxu0
      %536 = vmatprep.mubr.bf16.mxu0 0
      %537 = vmatmul.mubr.bf16.gmra.mrb[0].mxu0 %v340
      %v538 = vpop.f32.mrb[0].mxu0
      %v539 = vadd.f32 %v262, %v538
      %v540 = vpop.f32.mrb[0].mxu0
      %v541 = vpop.f32.mrb[0].mxu0
      %v542 = vadd.f32 %v262, %v541
      %v543 = vpop.f32.mrb[0].mxu0
      %544 = vmatprep.mubr.bf16.mxu0 0
      %545 = vmatmul.mubr.bf16.gmra.mrb[0].mxu0 %v341
      %v546 = vpop.f32.mrb[0].mxu0
      %v547 = vadd.f32 %v262, %v546
      %v548 = vpop.f32.mrb[0].mxu0
      %v549 = vpop.f32.mrb[0].mxu0
      %v550 = vadd.f32 %v262, %v549
      %v551 = vpop.f32.mrb[0].mxu0
      %552 = vmatprep.mubr.bf16.mxu0 0
      %553 = vmatmul.mubr.bf16.gmra.mrb[0].mxu0 %v342
      %v554 = vpop.f32.mrb[0].mxu0
      %v555 = vadd.f32 %v262, %v554
      %v556 = vpop.f32.mrb[0].mxu0
      %v557 = vpop.f32.mrb[0].mxu0
      %v558 = vadd.f32 %v262, %v557
      %v559 = vpop.f32.mrb[0].mxu0
      %560 = vmatprep.mubr.bf16.mxu0 0
      %561 = vmatmul.mubr.bf16.gmra.mrb[0].mxu0 %v343
      %v562 = vpop.f32.mrb[0].mxu0
      %v563 = vadd.f32 %v262, %v562
      %v564 = vpop.f32.mrb[0].mxu0
      %v565 = vpop.f32.mrb[0].mxu0
      %v566 = vadd.f32 %v262, %v565
      %v567 = vpop.f32.mrb[0].mxu0
      %568 = vdwg.mxu0
      %v569 = vxor.u32 %v443, 2147483648
      %v570 = vxor.u32 %v446, 2147483648
      %v571 = vxor.u32 %v451, 2147483648
      %v572 = vxor.u32 %v454, 2147483648
      %v573 = vxor.u32 %v459, 2147483648
      %v574 = vxor.u32 %v462, 2147483648
      %v575 = vxor.u32 %v467, 2147483648
      %v576 = vxor.u32 %v470, 2147483648
      %v577 = vxor.u32 %v475, 2147483648
      %v578 = vxor.u32 %v478, 2147483648
      %v579 = vxor.u32 %v483, 2147483648
      %v580 = vxor.u32 %v486, 2147483648
      %v581 = vxor.u32 %v491, 2147483648
      %v582 = vxor.u32 %v494, 2147483648
      %v583 = vxor.u32 %v499, 2147483648
      %v584 = vxor.u32 %v502, 2147483648
      %v585 = vxor.u32 %v507, 2147483648
      %v586 = vxor.u32 %v510, 2147483648
      %v587 = vxor.u32 %v515, 2147483648
      %v588 = vxor.u32 %v518, 2147483648
      %v589 = vxor.u32 %v523, 2147483648
      %v590 = vxor.u32 %v526, 2147483648
      %v591 = vxor.u32 %v531, 2147483648
      %v592 = vxor.u32 %v534, 2147483648
      %v593 = vxor.u32 %v539, 2147483648
      %v594 = vxor.u32 %v542, 2147483648
      %v595 = vxor.u32 %v547, 2147483648
      %v596 = vxor.u32 %v550, 2147483648
      %v597 = vxor.u32 %v555, 2147483648
      %v598 = vxor.u32 %v558, 2147483648
      %v599 = vxor.u32 %v563, 2147483648
      %v600 = vxor.u32 %v566, 2147483648
      %v601 = vmul.f32 %v569, 1.442695
      %v602 = vpow.pop %v601
      %v603 = vmul.f32 %v570, 1.442695
      %v604 = vpow.pop %v603
      %v605 = vmul.f32 %v571, 1.442695
      %v606 = vpow.pop %v605
      %v607 = vmul.f32 %v572, 1.442695
      %v608 = vpow.pop %v607
      %v609 = vmul.f32 %v573, 1.442695
      %v610 = vpow.pop %v609
      %v611 = vmul.f32 %v574, 1.442695
      %v612 = vpow.pop %v611
      %v613 = vmul.f32 %v575, 1.442695
      %v614 = vpow.pop %v613
      %v615 = vmul.f32 %v576, 1.442695
      %v616 = vpow.pop %v615
      %v617 = vmul.f32 %v577, 1.442695
      %v618 = vpow.pop %v617
      %v619 = vmul.f32 %v578, 1.442695
      %v620 = vpow.pop %v619
      %v621 = vmul.f32 %v579, 1.442695
      %v622 = vpow.pop %v621
      %v623 = vmul.f32 %v580, 1.442695
      %v624 = vpow.pop %v623
      %v625 = vmul.f32 %v581, 1.442695
      %v626 = vpow.pop %v625
      %v627 = vmul.f32 %v582, 1.442695
      %v628 = vpow.pop %v627
      %v629 = vmul.f32 %v583, 1.442695
      %v630 = vpow.pop %v629
      %v631 = vmul.f32 %v584, 1.442695
      %v632 = vpow.pop %v631
      %v633 = vmul.f32 %v585, 1.442695
      %v634 = vpow.pop %v633
      %v635 = vmul.f32 %v586, 1.442695
      %v636 = vpow.pop %v635
      %v637 = vmul.f32 %v587, 1.442695
      %v638 = vpow.pop %v637
      %v639 = vmul.f32 %v588, 1.442695
      %v640 = vpow.pop %v639
      %v641 = vmul.f32 %v589, 1.442695
      %v642 = vpow.pop %v641
      %v643 = vmul.f32 %v590, 1.442695
      %v644 = vpow.pop %v643
      %v645 = vmul.f32 %v591, 1.442695
      %v646 = vpow.pop %v645
      %v647 = vmul.f32 %v592, 1.442695
      %v648 = vpow.pop %v647
      %v649 = vmul.f32 %v593, 1.442695
      %v650 = vpow.pop %v649
      %v651 = vmul.f32 %v594, 1.442695
      %v652 = vpow.pop %v651
      %v653 = vmul.f32 %v595, 1.442695
      %v654 = vpow.pop %v653
      %v655 = vmul.f32 %v596, 1.442695
      %v656 = vpow.pop %v655
      %v657 = vmul.f32 %v597, 1.442695
      %v658 = vpow.pop %v657
      %v659 = vmul.f32 %v598, 1.442695
      %v660 = vpow.pop %v659
      %v661 = vmul.f32 %v599, 1.442695
      %v662 = vpow.pop %v661
      %v663 = vmul.f32 %v600, 1.442695
      %v664 = vpow.pop %v663
      %v665 = vadd.f32 %v602, 1.0
      %v666 = vadd.f32 %v604, 1.0
      %v667 = vadd.f32 %v606, 1.0
      %v668 = vadd.f32 %v608, 1.0
      %v669 = vadd.f32 %v610, 1.0
      %v670 = vadd.f32 %v612, 1.0
      %v671 = vadd.f32 %v614, 1.0
      %v672 = vadd.f32 %v616, 1.0
      %v673 = vadd.f32 %v618, 1.0
      %v674 = vadd.f32 %v620, 1.0
      %v675 = vadd.f32 %v622, 1.0
      %v676 = vadd.f32 %v624, 1.0
      %v677 = vadd.f32 %v626, 1.0
      %v678 = vadd.f32 %v628, 1.0
      %v679 = vadd.f32 %v630, 1.0
      %v680 = vadd.f32 %v632, 1.0
      %v681 = vadd.f32 %v634, 1.0
      %v682 = vadd.f32 %v636, 1.0
      %v683 = vadd.f32 %v638, 1.0
      %v684 = vadd.f32 %v640, 1.0
      %v685 = vadd.f32 %v642, 1.0
      %v686 = vadd.f32 %v644, 1.0
      %v687 = vadd.f32 %v646, 1.0
      %v688 = vadd.f32 %v648, 1.0
      %v689 = vadd.f32 %v650, 1.0
      %v690 = vadd.f32 %v652, 1.0
      %v691 = vadd.f32 %v654, 1.0
      %v692 = vadd.f32 %v656, 1.0
      %v693 = vadd.f32 %v658, 1.0
      %v694 = vadd.f32 %v660, 1.0
      %v695 = vadd.f32 %v662, 1.0
      %v696 = vadd.f32 %v664, 1.0
      %v697 = vrcp.pop %v665
      %v698 = vmul.f32 1.0, %v697
      %v699 = vrcp.pop %v666
      %v700 = vmul.f32 1.0, %v699
      %v701 = vrcp.pop %v667
      %v702 = vmul.f32 1.0, %v701
      %v703 = vrcp.pop %v668
      %v704 = vmul.f32 1.0, %v703
      %v705 = vrcp.pop %v669
      %v706 = vmul.f32 1.0, %v705
      %v707 = vrcp.pop %v670
      %v708 = vmul.f32 1.0, %v707
      %v709 = vrcp.pop %v671
      %v710 = vmul.f32 1.0, %v709
      %v711 = vrcp.pop %v672
      %v712 = vmul.f32 1.0, %v711
      %v713 = vrcp.pop %v673
      %v714 = vmul.f32 1.0, %v713
      %v715 = vrcp.pop %v674
      %v716 = vmul.f32 1.0, %v715
      %v717 = vrcp.pop %v675
      %v718 = vmul.f32 1.0, %v717
      %v719 = vrcp.pop %v676
      %v720 = vmul.f32 1.0, %v719
      %v721 = vrcp.pop %v677
      %v722 = vmul.f32 1.0, %v721
      %v723 = vrcp.pop %v678
      %v724 = vmul.f32 1.0, %v723
      %v725 = vrcp.pop %v679
      %v726 = vmul.f32 1.0, %v725
      %v727 = vrcp.pop %v680
      %v728 = vmul.f32 1.0, %v727
      %v729 = vrcp.pop %v681
      %v730 = vmul.f32 1.0, %v729
      %v731 = vrcp.pop %v682
      %v732 = vmul.f32 1.0, %v731
      %v733 = vrcp.pop %v683
      %v734 = vmul.f32 1.0, %v733
      %v735 = vrcp.pop %v684
      %v736 = vmul.f32 1.0, %v735
      %v737 = vrcp.pop %v685
      %v738 = vmul.f32 1.0, %v737
      %v739 = vrcp.pop %v686
      %v740 = vmul.f32 1.0, %v739
      %v741 = vrcp.pop %v687
      %v742 = vmul.f32 1.0, %v741
      %v743 = vrcp.pop %v688
      %v744 = vmul.f32 1.0, %v743
      %v745 = vrcp.pop %v689
      %v746 = vmul.f32 1.0, %v745
      %v747 = vrcp.pop %v690
      %v748 = vmul.f32 1.0, %v747
      %v749 = vrcp.pop %v691
      %v750 = vmul.f32 1.0, %v749
      %v751 = vrcp.pop %v692
      %v752 = vmul.f32 1.0, %v751
      %v753 = vrcp.pop %v693
      %v754 = vmul.f32 1.0, %v753
      %v755 = vrcp.pop %v694
      %v756 = vmul.f32 1.0, %v755
      %v757 = vrcp.pop %v695
      %v758 = vmul.f32 1.0, %v757
      %v759 = vrcp.pop %v696
      %v760 = vmul.f32 1.0, %v759
      %v761 = vmul.f32 %v443, %v698
      %v762 = vmul.f32 %v446, %v700
      %v763 = vmul.f32 %v451, %v702
      %v764 = vmul.f32 %v454, %v704
      %v765 = vmul.f32 %v459, %v706
      %v766 = vmul.f32 %v462, %v708
      %v767 = vmul.f32 %v467, %v710
      %v768 = vmul.f32 %v470, %v712
      %v769 = vmul.f32 %v475, %v714
      %v770 = vmul.f32 %v478, %v716
      %v771 = vmul.f32 %v483, %v718
      %v772 = vmul.f32 %v486, %v720
      %v773 = vmul.f32 %v491, %v722
      %v774 = vmul.f32 %v494, %v724
      %v775 = vmul.f32 %v499, %v726
      %v776 = vmul.f32 %v502, %v728
      %v777 = vmul.f32 %v507, %v730
      %v778 = vmul.f32 %v510, %v732
      %v779 = vmul.f32 %v515, %v734
      %v780 = vmul.f32 %v518, %v736
      %v781 = vmul.f32 %v523, %v738
      %v782 = vmul.f32 %v526, %v740
      %v783 = vmul.f32 %v531, %v742
      %v784 = vmul.f32 %v534, %v744
      %v785 = vmul.f32 %v539, %v746
      %v786 = vmul.f32 %v542, %v748
      %v787 = vmul.f32 %v547, %v750
      %v788 = vmul.f32 %v550, %v752
      %v789 = vmul.f32 %v555, %v754
      %v790 = vmul.f32 %v558, %v756
      %v791 = vmul.f32 %v563, %v758
      %v792 = vmul.f32 %v566, %v760
      %793 = vst [vmem:[%s206] sm:$0xff] %v761
      %794 = vst [vmem:[%s206 + $0x8] sm:$0xff] %v762
      %795 = vst [vmem:[%s206 + $0x10] sm:$0xff] %v763
      %796 = vst [vmem:[%s206 + $0x18] sm:$0xff] %v764
      %797 = vst [vmem:[%s206 + $0x20] sm:$0xff] %v765
      %798 = vst [vmem:[%s206 + $0x28] sm:$0xff] %v766
      %799 = vst [vmem:[%s206 + $0x30] sm:$0xff] %v767
      %800 = vst [vmem:[%s206 + $0x38] sm:$0xff] %v768
      %801 = vst [vmem:[%s206 + $0x40] sm:$0xff] %v769
      %802 = vst [vmem:[%s206 + $0x48] sm:$0xff] %v770
      %803 = vst [vmem:[%s206 + $0x50] sm:$0xff] %v771
      %804 = vst [vmem:[%s206 + $0x58] sm:$0xff] %v772
      %805 = vst [vmem:[%s206 + $0x60] sm:$0xff] %v773
      %806 = vst [vmem:[%s206 + $0x68] sm:$0xff] %v774
      %807 = vst [vmem:[%s206 + $0x70] sm:$0xff] %v775
      %808 = vst [vmem:[%s206 + $0x78] sm:$0xff] %v776
      %809 = vst [vmem:[%s206 + $0x80] sm:$0xff] %v777
      %810 = vst [vmem:[%s206 + $0x88] sm:$0xff] %v778
      %811 = vst [vmem:[%s206 + $0x90] sm:$0xff] %v779
      %812 = vst [vmem:[%s206 + $0x98] sm:$0xff] %v780
      %813 = vst [vmem:[%s206 + $0xa0] sm:$0xff] %v781
      %814 = vst [vmem:[%s206 + $0xa8] sm:$0xff] %v782
      %815 = vst [vmem:[%s206 + $0xb0] sm:$0xff] %v783
      %816 = vst [vmem:[%s206 + $0xb8] sm:$0xff] %v784
      %817 = vst [vmem:[%s206 + $0xc0] sm:$0xff] %v785
      %818 = vst [vmem:[%s206 + $0xc8] sm:$0xff] %v786
      %819 = vst [vmem:[%s206 + $0xd0] sm:$0xff] %v787
      %820 = vst [vmem:[%s206 + $0xd8] sm:$0xff] %v788
      %821 = vst [vmem:[%s206 + $0xe0] sm:$0xff] %v789
      %822 = vst [vmem:[%s206 + $0xe8] sm:$0xff] %v790
      %823 = vst [vmem:[%s206 + $0xf0] sm:$0xff] %v791
      %824 = vst [vmem:[%s206 + $0xf8] sm:$0xff] %v792
      %s825 = smul.u32 32, %s18
      %p826 = scmp.lt.s32.totalorder %s825, 63
      %s827 = scalar_select %p826, %s825, 63
      %p828 = scmp.lt.s32.totalorder %s19, 0
      %s829 = scalar_select %p828, %s19, 0
      %s830 = sadd.s32 %s829, %s827
      %s831 = smul.addr %s830, 8
      %s832 = scalar_lea.vmem %s3, %s831
      // Predicated region
      $region33: #{_lambda_.1} parent=31 // pred_check
        %p833 = pneg %p119
      $region34: #{_lambda_.1} parent=31 // pred_check_branch
        %835 = sbr.rel (%p833) target = $region36
      $region35: #{_lambda_.1} parent=31 // pred_region
        %s836 = smul.u32 32, %s18
      $region36: #{_lambda_.1} parent=31 // pred_fallthru
        _
    $region32: #{_lambda_.1} parent=5 // pred_fallthru
      _
    %p837 = scmp.le.s32.totalorder 2, %s9
    // Predicated region
    $region37: #{_lambda_.1} parent=5 // pred_check
      %p838 = pneg %p837
    $region38: #{_lambda_.1} parent=5 // pred_check_branch
      %840 = sbr.rel (%p838) target = $region40
    $region39: #{_lambda_.1} parent=5 // pred_region
      %s841 = ssub.s32 %s9, 2
      // Predicated region
      $region41: #{_lambda_.1} parent=39 // pred_check
        %p842 = pneg %p125
      $region42: #{_lambda_.1} parent=39 // pred_check_branch
        %844 = sbr.rel (%p842) target = $region44
      $region43: #{_lambda_.1} parent=39 // pred_region
        %s845 = smul.u32 32, %s20
        %p846 = scmp.lt.s32.totalorder %s845, 63
        %s847 = scalar_select %p846, %s845, 63
        %p848 = scmp.lt.s32.totalorder %s21, 0
        %s849 = scalar_select %p848, %s21, 0
        %s850 = sadd.s32 %s849, %s847
        %s851 = smul.addr %s850, 8
        %s852 = scalar_lea.vmem %s3, %s851
      $region44: #{_lambda_.1} parent=39 // pred_fallthru
        _
    $region40: #{_lambda_.1} parent=5 // pred_fallthru
      _
  $region6: #{_lambda_.1} parent=0 // loop_footer
    %s13 = sadd.s32 1, %s9
  $region7: #{_lambda_.1} parent=0 // loop_footer_branch
    %8 = sbr.rel target = $region3
  $region8: #{_lambda_.1} parent=0 // loop_exit
    _

</llo_original>
